<compile_context>
chip_gen: v7x
topology: tpu7x:2x2x1
jax: 0.10.0
libtpu: 0.0.40
codegen_flags: <defaults>
</compile_context>

<pallas_src>
import jax
import jax.numpy as jnp
from jax import lax
from jax.experimental import pallas as pl
from jax.experimental.pallas import tpu as pltpu


def _round_up(x, m):
    return ((x + m - 1) // m) * m


def _device_kind():
    try:
        return jax.devices()[0].device_kind.lower()
    except Exception:
        return ""


def _is_v6_or_newer(kind):
    return ("v6" in kind) or ("v7" in kind)


def _is_v7x(kind):
    return "v7" in kind


def _make_critic_kernel(use_bf16_act):
    """Build the kernel body; `use_bf16_act` is a trace-time (chip) constant."""
    bf16 = jnp.bfloat16

    def kernel(x_ref,
               w_fe1_ref, b_fe1_ref,
               w_fe2_ref, b_fe2_ref,
               w_c1_ref, b_c1_ref,
               w_c2_ref, b_c2_ref,
               out_ref):

        def layer(a_bf16, w_ref, b_ref):
            acc = jnp.dot(a_bf16, w_ref[...],
                          preferred_element_type=jnp.float32)
            if use_bf16_act:
                # v6e/v7x: bias-add + tanh on the bf16 EUP path; the bf16
                # result feeds the next MXU directly (no extra cast).
                return jnp.tanh((acc + b_ref[...]).astype(bf16))
            # v5e: no bf16 VPU/EUP -> keep tanh in f32, cast once for the MXU.
            return jnp.tanh(acc + b_ref[...]).astype(bf16)

        x = x_ref[...]                        # (TILE_B, S) bf16 (cast in wrapper)
        h1 = layer(x, w_fe1_ref, b_fe1_ref)   # (TILE_B, H1) bf16
        h2 = layer(h1, w_fe2_ref, b_fe2_ref)  # (TILE_B, H2) bf16
        h3 = layer(h2, w_c1_ref, b_c1_ref)    # (TILE_B, H3) bf16

        # Value head: (1, H3) . (TILE_B, H3) contracted on H3 -> (1, TILE_B).
        # Produces the lane-dense output row directly (no width-1 masked column).
        v = lax.dot_general(
            w_c2_ref[...], h3,
            dimension_numbers=(((1,), (1,)), ((), ())),
            preferred_element_type=jnp.float32)
        out_ref[...] = (v + b_c2_ref[0, 0]).astype(out_ref.dtype)

    return kernel


def _resident_spec(shape):
    """Full-array block with a constant index_map: fetched once, stays resident
    in VMEM. Single-buffered -- a constant-index block never needs the second
    pipeline buffer."""
    try:
        return pl.BlockSpec(shape, lambda i: (0, 0),
                            pipeline_mode=pl.Buffered(1))
    except (TypeError, AttributeError):
        # Older Pallas without pipeline_mode / Buffered: default double buffer.
        return pl.BlockSpec(shape, lambda i: (0, 0))


def _pick_tile_b(B, kind):
    """Batch-tile heuristic: 256-aligned on v6e/v7x (full MXU passes), 128 on
    older chips; >= 2 tiles on v7x (2 TensorCores); ~1024-row tiles for large B
    with the tile count chosen to minimize batch padding."""
    align = 256 if _is_v6_or_newer(kind) else 128
    if _is_v7x(kind) and B > align:
        n_tiles = max(2, pl.cdiv(B, 1024))
    else:
        n_tiles = pl.cdiv(B, 1024)
    return _round_up(pl.cdiv(B, n_tiles), align)


def critic_forward(x, params, *, tile_b=None):
    """x: [B, state_size] float32 -> [B, 1] float32 state values."""
    B, S = x.shape
    kind = _device_kind()
    use_bf16_act = _is_v6_or_newer(kind)

    if tile_b is None:
        tile_b = _pick_tile_b(B, kind)
    Bp = pl.cdiv(B, tile_b) * tile_b
    num_tiles = Bp // tile_b
    if num_tiles > 1:
        # Lane-dense output tiles must be 128-aligned when the batch is split.
        assert tile_b % 128 == 0, \
            "multi-tile grids require tile_b to be a multiple of 128"

    bf16 = jnp.bfloat16
    # Cast ALL MXU operands to bf16 once, in the wrapper: x (the only per-tile
    # streamed operand) halves its HBM DMA / VMEM tile, and the resident weight
    # copies are already half-width. Pad after the cast (half-size pad copy).
    x_bf16 = x.astype(bf16)
    if Bp != B:
        x_bf16 = jnp.pad(x_bf16, ((0, Bp - B), (0, 0)))

    w1 = params["w_fe1"].astype(bf16)
    w2 = params["w_fe2"].astype(bf16)
    w3 = params["w_c1"].astype(bf16)
    w4 = params["w_c2"].astype(bf16).reshape(1, -1)         # (1, H3) row
    b1 = params["b_fe1"].astype(jnp.float32)
    b2 = params["b_fe2"].astype(jnp.float32)
    b3 = params["b_c1"].astype(jnp.float32)
    b4 = params["b_c2"].astype(jnp.float32).reshape(1, 1)   # scalar -> SMEM

    H1, H2, H3 = w1.shape[1], w2.shape[1], w3.shape[1]

    in_specs = [
        pl.BlockSpec((tile_b, S), lambda i: (i, 0)),         # x: tiled over batch
        _resident_spec(w1.shape), _resident_spec(b1.shape),
        _resident_spec(w2.shape), _resident_spec(b2.shape),
        _resident_spec(w3.shape), _resident_spec(b3.shape),
        _resident_spec(w4.shape),
        pl.BlockSpec(memory_space=pltpu.MemorySpace.SMEM),   # b_c2 scalar
    ]
    out_specs = pl.BlockSpec((1, tile_b), lambda i: (0, i))  # lane-dense row

    # Rough VMEM budget: double-buffered bf16 x tiles + resident bf16 weights +
    # f32 biases/intermediates + output tiles; 2x headroom, capped to v7x 64 MiB.
    vmem_est = (2 * tile_b * S * 2
                + (S * H1 + H1 * H2 + H2 * H3 + H3) * 2
                + (H1 + H2 + H3) * 4
                + tile_b * (H1 + H2 + H3) * 4
                + 2 * 8 * tile_b * 4)
    vmem_limit = int(min(64 << 20, max(24 << 20, 2 * vmem_est)))

    weight_bytes = sum(int(a.size) * a.dtype.itemsize
                       for a in (w1, b1, w2, b2, w3, b3, w4, b4))
    cost = pl.CostEstimate(
        flops=2 * Bp * (S * H1 + H1 * H2 + H2 * H3 + H3),
        transcendentals=Bp * (H1 + H2 + H3),
        bytes_accessed=int(x_bf16.size) * 2 + Bp * 4 + weight_bytes)

    out_row = pl.pallas_call(
        _make_critic_kernel(use_bf16_act),
        out_shape=jax.ShapeDtypeStruct((1, Bp), jnp.float32),
        grid=(num_tiles,),
        in_specs=in_specs,
        out_specs=out_specs,
        compiler_params=pltpu.CompilerParams(
            dimension_semantics=("parallel",),
            vmem_limit_bytes=vmem_limit),
        cost_estimate=cost,
    )(x_bf16, w1, b1, w2, b2, w3, b3, w4, b4)

    # (1, Bp) lane-dense -> (B, 1) like CriticNetwork.forward.
    return out_row[0, :B].reshape(B, 1)


def init_params(key, state_size, hidsize1, hidsize2, hidsize):
    """Deterministic synthetic parameters (matches the module's layer shapes)."""
    ks = jax.random.split(key, 8)

    def lin(kw, kb, fan_in, fan_out):
        # uniform(-1/sqrt(fan_in), 1/sqrt(fan_in)) like torch.nn.Linear default
        bound = 1.0 / jnp.sqrt(fan_in)
        w = jax.random.uniform(kw, (fan_in, fan_out), jnp.float32, -bound, bound)
        b = jax.random.uniform(kb, (1, fan_out), jnp.float32, -bound, bound)
        return w, b

    w_fe1, b_fe1 = lin(ks[0], ks[1], state_size, hidsize1)
    w_fe2, b_fe2 = lin(ks[2], ks[3], hidsize1, hidsize2)
    w_c1, b_c1 = lin(ks[4], ks[5], hidsize2, hidsize)
    w_c2, b_c2 = lin(ks[6], ks[7], hidsize, 1)
    return dict(w_fe1=w_fe1, b_fe1=b_fe1, w_fe2=w_fe2, b_fe2=b_fe2,
                w_c1=w_c1, b_c1=b_c1, w_c2=w_c2, b_c2=b_c2)


def critic_reference_matched(x, p, use_bf16_act):
    """Pure-JAX reference mirroring the kernel arithmetic (bf16 MXU feed, f32
    accumulation, and on v6e/v7x bf16 bias-add + tanh)."""
    bf16 = jnp.bfloat16

    def mm(a, w):
        return jnp.dot(a.astype(bf16), w.astype(bf16),
                       preferred_element_type=jnp.float32)

    def act(acc, b):
        if use_bf16_act:
            return jnp.tanh((acc + b).astype(bf16))
        return jnp.tanh(acc + b).astype(bf16)

    h1 = act(mm(x, p["w_fe1"]), p["b_fe1"])
    h2 = act(mm(h1, p["w_fe2"]), p["b_fe2"])
    h3 = act(mm(h2, p["w_c1"]), p["b_c1"])
    return mm(h3, p["w_c2"]) + p["b_c2"]


def critic_reference_f32(x, p):
    h1 = jnp.tanh(x @ p["w_fe1"] + p["b_fe1"])
    h2 = jnp.tanh(h1 @ p["w_fe2"] + p["b_fe2"])
    h3 = jnp.tanh(h2 @ p["w_c1"] + p["b_c1"])
    return h3 @ p["w_c2"] + p["b_c2"]


if __name__ == "__main__":
    # Small shapes consistent with the module (scaled-down hidden sizes).
    B = 200
    STATE_SIZE = 32   # state_size
    HID1 = 64         # FeatureExtractorNetwork hidsize1 (orig 512)
    HID2 = 32         # FeatureExtractorNetwork hidsize2 (orig 256)
    HID = 32          # CriticNetwork hidsize (orig 256)

    key = jax.random.PRNGKey(0)
    k_x, k_p = jax.random.split(key)
    x = jax.random.normal(k_x, (B, STATE_SIZE), jnp.float32)
    params = init_params(k_p, STATE_SIZE, HID1, HID2, HID)

    # 1) Default (auto) tile selection: single chip-aligned tile covering B.
    out = jax.block_until_ready(critic_forward(x, params))
    assert out.shape == (B, 1)

    # 2) Explicit multi-tile grid: exercises batch padding (200 -> 256), a
    #    2-step parallel grid, and resident single-buffered weights.
    out_tiled = jax.block_until_ready(critic_forward(x, params, tile_b=128))
    assert out_tiled.shape == (B, 1)

    use_bf16_act = _is_v6_or_newer(_device_kind())
    ref_match = critic_reference_matched(x, params, use_bf16_act)
    ref_f32 = critic_reference_f32(x, params)
    for o in (out, out_tiled):
        # Tight check vs a reference using the same bf16/f32 mix as the kernel.
        assert jnp.allclose(o, ref_match, atol=1e-2, rtol=1e-2), \
            "mismatch vs precision-matched reference"
        # Loose semantic sanity check vs the pure-f32 PyTorch-equivalent math.
        assert jnp.allclose(o, ref_f32, atol=6e-2, rtol=6e-2), \
            "mismatch vs f32 reference"

    print("KERNEL_OK")
</pallas_src>

<mosaic_0001>
module attributes {stable_mosaic.version = 11 : i64} {
  func.func @kernel(%arg0: i32, %arg1: memref<256x32xbf16, #tpu.memory_space<vmem>>, %arg2: memref<32x64xbf16, #tpu.memory_space<vmem>>, %arg3: memref<1x64xf32, #tpu.memory_space<vmem>>, %arg4: memref<64x32xbf16, #tpu.memory_space<vmem>>, %arg5: memref<1x32xf32, #tpu.memory_space<vmem>>, %arg6: memref<32x32xbf16, #tpu.memory_space<vmem>>, %arg7: memref<1x32xf32, #tpu.memory_space<vmem>>, %arg8: memref<1x32xbf16, #tpu.memory_space<vmem>>, %arg9: memref<1x1xf32, #tpu.memory_space<smem>>, %arg10: memref<1x256xf32, #tpu.memory_space<vmem>>) attributes {dimension_semantics = [#tpu.dimension_semantics<parallel>], iteration_bounds = array<i64: 1>, scalar_prefetch = 0 : i64, scratch_operands = 0 : i64, tpu.core_type = #tpu.core_type<tc>, window_params = [{transform_indices = @transform_0, window_bounds = array<i64: 256, 32>}, {pipeline_mode = #tpu.pipeline_mode<synchronous>, transform_indices = @transform_1, window_bounds = array<i64: 32, 64>}, {pipeline_mode = #tpu.pipeline_mode<synchronous>, transform_indices = @transform_2, window_bounds = array<i64: 1, 64>}, {pipeline_mode = #tpu.pipeline_mode<synchronous>, transform_indices = @transform_3, window_bounds = array<i64: 64, 32>}, {pipeline_mode = #tpu.pipeline_mode<synchronous>, transform_indices = @transform_4, window_bounds = array<i64: 1, 32>}, {pipeline_mode = #tpu.pipeline_mode<synchronous>, transform_indices = @transform_5, window_bounds = array<i64: 32, 32>}, {pipeline_mode = #tpu.pipeline_mode<synchronous>, transform_indices = @transform_6, window_bounds = array<i64: 1, 32>}, {pipeline_mode = #tpu.pipeline_mode<synchronous>, transform_indices = @transform_7, window_bounds = array<i64: 1, 32>}, {transform_indices = @transform_8, window_bounds = array<i64: 1, 1>}, {transform_indices = @transform_9, window_bounds = array<i64: 1, 256>}]} {
    %c0 = arith.constant 0 : index
    %c0_0 = arith.constant 0 : index
    %0 = vector.load %arg1[%c0, %c0_0] : memref<256x32xbf16, #tpu.memory_space<vmem>>, vector<256x32xbf16>
    %c0_1 = arith.constant 0 : index
    %c0_2 = arith.constant 0 : index
    %1 = vector.load %arg2[%c0_1, %c0_2] : memref<32x64xbf16, #tpu.memory_space<vmem>>, vector<32x64xbf16>
    %cst = arith.constant dense<0.000000e+00> : vector<256x64xf32>
    %2 = tpu.matmul %0, %1, %cst {dimension_numbers = #tpu.dot_dimension_numbers<[1], [0], [0], [1], [0, 0, 1, 1], [], []>} : vector<256x32xbf16>, vector<32x64xbf16>, vector<256x64xf32> -> vector<256x64xf32>
    %c0_3 = arith.constant 0 : index
    %c0_4 = arith.constant 0 : index
    %3 = vector.load %arg3[%c0_3, %c0_4] : memref<1x64xf32, #tpu.memory_space<vmem>>, vector<1x64xf32>
    %4 = vector.broadcast %3 : vector<1x64xf32> to vector<256x64xf32>
    %5 = arith.addf %2, %4 : vector<256x64xf32>
    %6 = math.tanh %5 : vector<256x64xf32>
    %7 = arith.truncf %6 : vector<256x64xf32> to vector<256x64xbf16>
    %c0_5 = arith.constant 0 : index
    %c0_6 = arith.constant 0 : index
    %8 = vector.load %arg4[%c0_5, %c0_6] : memref<64x32xbf16, #tpu.memory_space<vmem>>, vector<64x32xbf16>
    %cst_7 = arith.constant dense<0.000000e+00> : vector<256x32xf32>
    %9 = tpu.matmul %7, %8, %cst_7 {dimension_numbers = #tpu.dot_dimension_numbers<[1], [0], [0], [1], [0, 0, 1, 1], [], []>} : vector<256x64xbf16>, vector<64x32xbf16>, vector<256x32xf32> -> vector<256x32xf32>
    %c0_8 = arith.constant 0 : index
    %c0_9 = arith.constant 0 : index
    %10 = vector.load %arg5[%c0_8, %c0_9] : memref<1x32xf32, #tpu.memory_space<vmem>>, vector<1x32xf32>
    %11 = vector.broadcast %10 : vector<1x32xf32> to vector<256x32xf32>
    %12 = arith.addf %9, %11 : vector<256x32xf32>
    %13 = math.tanh %12 : vector<256x32xf32>
    %14 = arith.truncf %13 : vector<256x32xf32> to vector<256x32xbf16>
    %c0_10 = arith.constant 0 : index
    %c0_11 = arith.constant 0 : index
    %15 = vector.load %arg6[%c0_10, %c0_11] : memref<32x32xbf16, #tpu.memory_space<vmem>>, vector<32x32xbf16>
    %cst_12 = arith.constant dense<0.000000e+00> : vector<256x32xf32>
    %16 = tpu.matmul %14, %15, %cst_12 {dimension_numbers = #tpu.dot_dimension_numbers<[1], [0], [0], [1], [0, 0, 1, 1], [], []>} : vector<256x32xbf16>, vector<32x32xbf16>, vector<256x32xf32> -> vector<256x32xf32>
    %c0_13 = arith.constant 0 : index
    %c0_14 = arith.constant 0 : index
    %17 = vector.load %arg7[%c0_13, %c0_14] : memref<1x32xf32, #tpu.memory_space<vmem>>, vector<1x32xf32>
    %18 = vector.broadcast %17 : vector<1x32xf32> to vector<256x32xf32>
    %19 = arith.addf %16, %18 : vector<256x32xf32>
    %20 = math.tanh %19 : vector<256x32xf32>
    %21 = arith.truncf %20 : vector<256x32xf32> to vector<256x32xbf16>
    %c0_15 = arith.constant 0 : index
    %c0_16 = arith.constant 0 : index
    %22 = vector.load %arg8[%c0_15, %c0_16] : memref<1x32xbf16, #tpu.memory_space<vmem>>, vector<1x32xbf16>
    %cst_17 = arith.constant dense<0.000000e+00> : vector<1x256xf32>
    %23 = tpu.matmul %22, %21, %cst_17 {dimension_numbers = #tpu.dot_dimension_numbers<[1], [1], [0], [0], [0, 0, 1, 0], [], []>} : vector<1x32xbf16>, vector<256x32xbf16>, vector<1x256xf32> -> vector<1x256xf32>
    %c0_18 = arith.constant 0 : index
    %c0_19 = arith.constant 0 : index
    %24 = memref.load %arg9[%c0_18, %c0_19] : memref<1x1xf32, #tpu.memory_space<smem>>
    %25 = vector.broadcast %24 : f32 to vector<1x256xf32>
    %26 = arith.addf %23, %25 : vector<1x256xf32>
    %c0_20 = arith.constant 0 : index
    %c0_21 = arith.constant 0 : index
    %27 = vector.load %arg10[%c0_20, %c0_21] : memref<1x256xf32, #tpu.memory_space<vmem>>, vector<1x256xf32>
    tpu.vector_store %arg10[%c0_20, %c0_21], %26 {strides = array<i32>} : memref<1x256xf32, #tpu.memory_space<vmem>>, vector<1x256xf32>,
    return
  }
  func.func @transform_0(%arg0: i32) -> (i32, i32) {
    %c0_i32 = arith.constant 0 : i32
    %c0_i32_0 = arith.constant 0 : i32
    return %arg0, %c0_i32 : i32, i32
  }
  func.func @transform_1(%arg0: i32) -> (i32, i32) {
    %c0_i32 = arith.constant 0 : i32
    %c0_i32_0 = arith.constant 0 : i32
    %c0_i32_1 = arith.constant 0 : i32
    return %c0_i32, %c0_i32_0 : i32, i32
  }
  func.func @transform_2(%arg0: i32) -> (i32, i32) {
    %c0_i32 = arith.constant 0 : i32
    %c0_i32_0 = arith.constant 0 : i32
    %c0_i32_1 = arith.constant 0 : i32
    return %c0_i32, %c0_i32_0 : i32, i32
  }
  func.func @transform_3(%arg0: i32) -> (i32, i32) {
    %c0_i32 = arith.constant 0 : i32
    %c0_i32_0 = arith.constant 0 : i32
    %c0_i32_1 = arith.constant 0 : i32
    return %c0_i32, %c0_i32_0 : i32, i32
  }
  func.func @transform_4(%arg0: i32) -> (i32, i32) {
    %c0_i32 = arith.constant 0 : i32
    %c0_i32_0 = arith.constant 0 : i32
    %c0_i32_1 = arith.constant 0 : i32
    return %c0_i32, %c0_i32_0 : i32, i32
  }
  func.func @transform_5(%arg0: i32) -> (i32, i32) {
    %c0_i32 = arith.constant 0 : i32
    %c0_i32_0 = arith.constant 0 : i32
    %c0_i32_1 = arith.constant 0 : i32
    return %c0_i32, %c0_i32_0 : i32, i32
  }
  func.func @transform_6(%arg0: i32) -> (i32, i32) {
    %c0_i32 = arith.constant 0 : i32
    %c0_i32_0 = arith.constant 0 : i32
    %c0_i32_1 = arith.constant 0 : i32
    return %c0_i32, %c0_i32_0 : i32, i32
  }
  func.func @transform_7(%arg0: i32) -> (i32, i32) {
    %c0_i32 = arith.constant 0 : i32
    %c0_i32_0 = arith.constant 0 : i32
    %c0_i32_1 = arith.constant 0 : i32
    return %c0_i32, %c0_i32_0 : i32, i32
  }
  func.func @transform_8(%arg0: i32) -> (i32, i32) {
    %c0_i32 = arith.constant 0 : i32
    %c0_i32_0 = arith.constant 0 : i32
    %c0_i32_1 = arith.constant 0 : i32
    return %c0_i32, %c0_i32_0 : i32, i32
  }
  func.func @transform_9(%arg0: i32) -> (i32, i32) {
    %c0_i32 = arith.constant 0 : i32
    %c0_i32_0 = arith.constant 0 : i32
    return %c0_i32, %arg0 : i32, i32
  }
}

</mosaic_0001>

<llo_original>
// kernel: tpu_custom_call.1
$region0: #{tpu_custom_call.1}
  #allocation0 [shape = 'u32[]', space=smem, size = 0x4, offset = 0x4, fixed_abs, tag = 'smem constant byte address 0x4 - core index']
  #allocation1 [shape = 'u32[144,128]{1,0:T(1,128)}', space=vmem, size = 0x12000, scoped, tag = 'internal scratch']
  #allocation2 [shape = 'f32[1,1]{1,0:T(1,128)S(6)}', space=smem, size = 0x200, scoped, tag = 'scoped memory for tpu_custom_call.1']
  %s0 = inlined_call_operand.vmem [shape: bf16[256,32], index: 0, kind: input, shape index: {}]
  %s1 = inlined_call_operand.vmem [shape: bf16[32,64], index: 1, kind: input, shape index: {}]
  %s2 = inlined_call_operand.vmem [shape: f32[1,64], index: 2, kind: input, shape index: {}]
  %s3 = inlined_call_operand.vmem [shape: bf16[64,32], index: 3, kind: input, shape index: {}]
  %s4 = inlined_call_operand.vmem [shape: f32[1,32], index: 4, kind: input, shape index: {}]
  %s5 = inlined_call_operand.vmem [shape: bf16[32,32], index: 5, kind: input, shape index: {}]
  %s6 = inlined_call_operand.vmem [shape: f32[1,32], index: 6, kind: input, shape index: {}]
  %s7 = inlined_call_operand.vmem [shape: bf16[1,32], index: 7, kind: input, shape index: {}]
  %s8 = inlined_call_operand.<no memory space> [shape: f32[1,1], index: 8, kind: input, shape index: {}]
  %s9 = inlined_call_operand.hbm [shape: f32[1,256], index: 9, kind: output, shape index: {}]
  %s10 = sld [smem:[#allocation0]]
  $region46: #{tpu_custom_call.1} parent=0
    _
  %s12 = ssub.s32 1, %s10
  %s13 = scalar_select 0, %s12, %s10
  %14 = sst [smem:[#allocation2]] %s8
  $region1: #{tpu_custom_call.1} parent=0
    #allocation3 [shape = 'u8[1024]{0}', space=vmem, size = 0x400, scoped, tag = 'output window, operand 0, single buffered']
    #allocation4 [shape = 's32[1]{0}', space=sflag, size = 0x4, scoped, tag = 'scoped memory for tpu_custom_call.1']
    %15 = vsyncpa [#allocation4], 0
    // Predicated region
    $region2: #{tpu_custom_call.1} parent=1 // pred_check
      _
    $region3: #{tpu_custom_call.1} parent=1 // pred_check_branch
      %17 = sbr.rel (0) target = $region5
    $region4: #{tpu_custom_call.1} parent=1 // pred_region
      _
    $region5: #{tpu_custom_call.1} parent=1 // pred_fallthru
      _
    // Predicated region
    $region6: #{tpu_custom_call.1} parent=1 // pred_check
      _
    $region7: #{tpu_custom_call.1} parent=1 // pred_check_branch
      %19 = sbr.rel (0) target = $region9
    $region8: #{tpu_custom_call.1} parent=1 // pred_region
      _
    $region9: #{tpu_custom_call.1} parent=1 // pred_fallthru
      _
    // Predicated region
    $region10: #{tpu_custom_call.1} parent=1 // pred_check
      _
    $region11: #{tpu_custom_call.1} parent=1 // pred_check_branch
      %21 = sbr.rel (0) target = $region13
    $region12: #{tpu_custom_call.1} parent=1 // pred_region
      _
    $region13: #{tpu_custom_call.1} parent=1 // pred_fallthru
      _
    // Predicated region
    $region14: #{tpu_custom_call.1} parent=1 // pred_check
      _
    $region15: #{tpu_custom_call.1} parent=1 // pred_check_branch
      %23 = sbr.rel (0) target = $region17
    $region16: #{tpu_custom_call.1} parent=1 // pred_region
      _
    $region17: #{tpu_custom_call.1} parent=1 // pred_fallthru
      _
    // Predicated region
    $region18: #{tpu_custom_call.1} parent=1 // pred_check
      _
    $region19: #{tpu_custom_call.1} parent=1 // pred_check_branch
      %25 = sbr.rel (0) target = $region21
    $region20: #{tpu_custom_call.1} parent=1 // pred_region
      _
    $region21: #{tpu_custom_call.1} parent=1 // pred_fallthru
      _
    // Predicated region
    $region22: #{tpu_custom_call.1} parent=1 // pred_check
      _
    $region23: #{tpu_custom_call.1} parent=1 // pred_check_branch
      %27 = sbr.rel (0) target = $region25
    $region24: #{tpu_custom_call.1} parent=1 // pred_region
      _
    $region25: #{tpu_custom_call.1} parent=1 // pred_fallthru
      _
    // Predicated region
    $region26: #{tpu_custom_call.1} parent=1 // pred_check
      _
    $region27: #{tpu_custom_call.1} parent=1 // pred_check_branch
      %29 = sbr.rel (0) target = $region29
    $region28: #{tpu_custom_call.1} parent=1 // pred_region
      _
    $region29: #{tpu_custom_call.1} parent=1 // pred_fallthru
      _
    // Predicated region
    $region30: #{tpu_custom_call.1} parent=1 // pred_check
      _
    $region31: #{tpu_custom_call.1} parent=1 // pred_check_branch
      %31 = sbr.rel (0) target = $region33
    $region32: #{tpu_custom_call.1} parent=1 // pred_region
      _
    $region33: #{tpu_custom_call.1} parent=1 // pred_fallthru
      _
    // Predicated region
    $region34: #{tpu_custom_call.1} parent=1 // pred_check
      _
    $region35: #{tpu_custom_call.1} parent=1 // pred_check_branch
      %33 = sbr.rel (0) target = $region37
    $region36: #{tpu_custom_call.1} parent=1 // pred_region
      _
    $region37: #{tpu_custom_call.1} parent=1 // pred_fallthru
      _
    %v35 = vld [vmem:[%s0] sm:$0xf]
    %v36 = vld [vmem:[%s0 + $0x4] sm:$0xf]
    %v37 = vld [vmem:[%s0 + $0x8] sm:$0xf]
    %v38 = vld [vmem:[%s0 + $0xc] sm:$0xf]
    %v39 = vld [vmem:[%s0 + $0x10] sm:$0xf]
    %v40 = vld [vmem:[%s0 + $0x14] sm:$0xf]
    %v41 = vld [vmem:[%s0 + $0x18] sm:$0xf]
    %v42 = vld [vmem:[%s0 + $0x1c] sm:$0xf]
    %v43 = vld [vmem:[%s0 + $0x20] sm:$0xf]
    %v44 = vld [vmem:[%s0 + $0x24] sm:$0xf]
    %v45 = vld [vmem:[%s0 + $0x28] sm:$0xf]
    %v46 = vld [vmem:[%s0 + $0x2c] sm:$0xf]
    %v47 = vld [vmem:[%s0 + $0x30] sm:$0xf]
    %v48 = vld [vmem:[%s0 + $0x34] sm:$0xf]
    %v49 = vld [vmem:[%s0 + $0x38] sm:$0xf]
    %v50 = vld [vmem:[%s0 + $0x3c] sm:$0xf]
    %v51 = vld [vmem:[%s0 + $0x40] sm:$0xf]
    %v52 = vld [vmem:[%s0 + $0x44] sm:$0xf]
    %v53 = vld [vmem:[%s0 + $0x48] sm:$0xf]
    %v54 = vld [vmem:[%s0 + $0x4c] sm:$0xf]
    %v55 = vld [vmem:[%s0 + $0x50] sm:$0xf]
    %v56 = vld [vmem:[%s0 + $0x54] sm:$0xf]
    %v57 = vld [vmem:[%s0 + $0x58] sm:$0xf]
    %v58 = vld [vmem:[%s0 + $0x5c] sm:$0xf]
    %v59 = vld [vmem:[%s0 + $0x60] sm:$0xf]
    %v60 = vld [vmem:[%s0 + $0x64] sm:$0xf]
    %v61 = vld [vmem:[%s0 + $0x68] sm:$0xf]
    %v62 = vld [vmem:[%s0 + $0x6c] sm:$0xf]
    %v63 = vld [vmem:[%s0 + $0x70] sm:$0xf]
    %v64 = vld [vmem:[%s0 + $0x74] sm:$0xf]
    %v65 = vld [vmem:[%s0 + $0x78] sm:$0xf]
    %v66 = vld [vmem:[%s0 + $0x7c] sm:$0xf]
    %v67 = vld [vmem:[%s1] sm:$0xf]
    %v68 = vld [vmem:[%s1 + $0x4] sm:$0xf]
    %v69 = vld [vmem:[%s1 + $0x8] sm:$0xf]
    %v70 = vld [vmem:[%s1 + $0xc] sm:$0xf]
    %v71 = vld [vmem:[%s2] sm:$0x1]
    %v73 = vlaneseq
    %v74 = vshrl.u32 %v73, 7
    %v75 = vsub.s32 0, %v74
    %v76 = vrot.slane %v71, %v75
    %v110 = vunpack.c.l.b16 %v35
    %v111 = vunpack.c.l.b16 %v36
    %v112 = vunpack.c.l.b16 %v37
    %v113 = vunpack.c.l.b16 %v38
    %v114 = vunpack.c.l.b16 %v39
    %v115 = vunpack.c.l.b16 %v40
    %v116 = vunpack.c.l.b16 %v41
    %v117 = vunpack.c.l.b16 %v42
    %v118 = vunpack.c.l.b16 %v43
    %v119 = vunpack.c.l.b16 %v44
    %v120 = vunpack.c.l.b16 %v45
    %v121 = vunpack.c.l.b16 %v46
    %v122 = vunpack.c.l.b16 %v47
    %v123 = vunpack.c.l.b16 %v48
    %v124 = vunpack.c.l.b16 %v49
    %v125 = vunpack.c.l.b16 %v50
    %v126 = vunpack.c.l.b16 %v51
    %v127 = vunpack.c.l.b16 %v52
    %v128 = vunpack.c.l.b16 %v53
    %v129 = vunpack.c.l.b16 %v54
    %v130 = vunpack.c.l.b16 %v55
    %v131 = vunpack.c.l.b16 %v56
    %v132 = vunpack.c.l.b16 %v57
    %v133 = vunpack.c.l.b16 %v58
    %v134 = vunpack.c.l.b16 %v59
    %v135 = vunpack.c.l.b16 %v60
    %v136 = vunpack.c.l.b16 %v61
    %v137 = vunpack.c.l.b16 %v62
    %v138 = vunpack.c.l.b16 %v63
    %v139 = vunpack.c.l.b16 %v64
    %v140 = vunpack.c.l.b16 %v65
    %v141 = vunpack.c.l.b16 %v66
    %v142 = vpack.c.b16 %v111, %v110
    %v143 = vpack.c.b16 %v113, %v112
    %v144 = vpack.c.b16 %v115, %v114
    %v145 = vpack.c.b16 %v117, %v116
    %v146 = vpack.c.b16 %v119, %v118
    %v147 = vpack.c.b16 %v121, %v120
    %v148 = vpack.c.b16 %v123, %v122
    %v149 = vpack.c.b16 %v125, %v124
    %v150 = vpack.c.b16 %v127, %v126
    %v151 = vpack.c.b16 %v129, %v128
    %v152 = vpack.c.b16 %v131, %v130
    %v153 = vpack.c.b16 %v133, %v132
    %v154 = vpack.c.b16 %v135, %v134
    %v155 = vpack.c.b16 %v137, %v136
    %v156 = vpack.c.b16 %v139, %v138
    %v157 = vpack.c.b16 %v141, %v140
    %v162 = vunpack.c.l.b16 %v67
    %v163 = vunpack.c.l.b16 %v68
    %v164 = vunpack.c.l.b16 %v69
    %v165 = vunpack.c.l.b16 %v70
    %v166 = vpack.c.b16 %v163, %v162
    %v167 = vpack.c.b16 %v165, %v164
    %vm170 = vcmask 261120
    %v172 = vsel %vm170, %v142, 0
    %v175 = vsel %vm170, %v143, 0
    %v178 = vsel %vm170, %v144, 0
    %v181 = vsel %vm170, %v145, 0
    %v184 = vsel %vm170, %v146, 0
    %v187 = vsel %vm170, %v147, 0
    %v190 = vsel %vm170, %v148, 0
    %v193 = vsel %vm170, %v149, 0
    %v196 = vsel %vm170, %v150, 0
    %v199 = vsel %vm170, %v151, 0
    %v202 = vsel %vm170, %v152, 0
    %v205 = vsel %vm170, %v153, 0
    %v208 = vsel %vm170, %v154, 0
    %v211 = vsel %vm170, %v155, 0
    %v214 = vsel %vm170, %v156, 0
    %v217 = vsel %vm170, %v157, 0
    %219 = vmatprep.subr.bf16.mxu0 0
    %220 = vmatpush1.bf16.msra.mxu0 %v166
    %221 = vmatprep.subr.bf16.mxu0 0
    %222 = vmatpush1.bf16.msra.mxu0 %v167
    %223 = vmatprep.subr.bf16.mxu0 0
    %224 = vmatpush1.bf16.msra.mxu0 0
    %225 = vmatprep.subr.bf16.mxu0 0
    %226 = vmatpush1.bf16.msra.mxu0 0
    %227 = vmatprep.subr.bf16.mxu0 0
    %228 = vmatpush1.bf16.msra.mxu0 0
    %229 = vmatprep.subr.bf16.mxu0 0
    %230 = vmatpush1.bf16.msra.mxu0 0
    %231 = vmatprep.subr.bf16.mxu0 0
    %232 = vmatpush1.bf16.msra.mxu0 0
    %233 = vmatprep.subr.bf16.mxu0 0
    %234 = vmatpush1.bf16.msra.mxu0 0
    %235 = vmatprep.subr.bf16.mxu0 0
    %236 = vmatpush1.bf16.msra.mxu0 0
    %237 = vmatprep.subr.bf16.mxu0 0
    %238 = vmatpush1.bf16.msra.mxu0 0
    %239 = vmatprep.subr.bf16.mxu0 0
    %240 = vmatpush1.bf16.msra.mxu0 0
    %241 = vmatprep.subr.bf16.mxu0 0
    %242 = vmatpush1.bf16.msra.mxu0 0
    %243 = vmatprep.subr.bf16.mxu0 0
    %244 = vmatpush1.bf16.msra.mxu0 0
    %245 = vmatprep.subr.bf16.mxu0 0
    %246 = vmatpush1.bf16.msra.mxu0 0
    %247 = vmatprep.subr.bf16.mxu0 0
    %248 = vmatpush1.bf16.msra.mxu0 0
    %249 = vmatprep.subr.bf16.mxu0 0
    %250 = vmatpush1.bf16.msra.mxu0 0
    %251 = vmatprep.mubr.bf16.mxu0 0
    %252 = vmatmul.mubr.bf16.gmra.mrb[0].mxu0 %v172
    %v253 = vpop.f32.mrb[0].mxu0
    %v254 = vadd.f32 %v76, %v253
    %v255 = vpop.f32.mrb[0].mxu0
    %v256 = vpop.f32.mrb[0].mxu0
    %v257 = vadd.f32 %v76, %v256
    %v258 = vpop.f32.mrb[0].mxu0
    %259 = vmatprep.mubr.bf16.mxu0 0
    %260 = vmatmul.mubr.bf16.gmra.mrb[0].mxu0 %v175
    %v261 = vpop.f32.mrb[0].mxu0
    %v262 = vadd.f32 %v76, %v261
    %v263 = vpop.f32.mrb[0].mxu0
    %v264 = vpop.f32.mrb[0].mxu0
    %v265 = vadd.f32 %v76, %v264
    %v266 = vpop.f32.mrb[0].mxu0
    %267 = vmatprep.mubr.bf16.mxu0 0
    %268 = vmatmul.mubr.bf16.gmra.mrb[0].mxu0 %v178
    %v269 = vpop.f32.mrb[0].mxu0
    %v270 = vadd.f32 %v76, %v269
    %v271 = vpop.f32.mrb[0].mxu0
    %v272 = vpop.f32.mrb[0].mxu0
    %v273 = vadd.f32 %v76, %v272
    %v274 = vpop.f32.mrb[0].mxu0
    %275 = vmatprep.mubr.bf16.mxu0 0
    %276 = vmatmul.mubr.bf16.gmra.mrb[0].mxu0 %v181
    %v277 = vpop.f32.mrb[0].mxu0
    %v278 = vadd.f32 %v76, %v277
    %v279 = vpop.f32.mrb[0].mxu0
    %v280 = vpop.f32.mrb[0].mxu0
    %v281 = vadd.f32 %v76, %v280
    %v282 = vpop.f32.mrb[0].mxu0
    %283 = vmatprep.mubr.bf16.mxu0 0
    %284 = vmatmul.mubr.bf16.gmra.mrb[0].mxu0 %v184
    %v285 = vpop.f32.mrb[0].mxu0
    %v286 = vadd.f32 %v76, %v285
    %v287 = vpop.f32.mrb[0].mxu0
    %v288 = vpop.f32.mrb[0].mxu0
    %v289 = vadd.f32 %v76, %v288
    %v290 = vpop.f32.mrb[0].mxu0
    %291 = vmatprep.mubr.bf16.mxu0 0
    %292 = vmatmul.mubr.bf16.gmra.mrb[0].mxu0 %v187
    %v293 = vpop.f32.mrb[0].mxu0
    %v294 = vadd.f32 %v76, %v293
    %v295 = vpop.f32.mrb[0].mxu0
    %v296 = vpop.f32.mrb[0].mxu0
    %v297 = vadd.f32 %v76, %v296
    %v298 = vpop.f32.mrb[0].mxu0
    %299 = vmatprep.mubr.bf16.mxu0 0
    %300 = vmatmul.mubr.bf16.gmra.mrb[0].mxu0 %v190
    %v301 = vpop.f32.mrb[0].mxu0
    %v302 = vadd.f32 %v76, %v301
    %v303 = vpop.f32.mrb[0].mxu0
    %v304 = vpop.f32.mrb[0].mxu0
    %v305 = vadd.f32 %v76, %v304
    %v306 = vpop.f32.mrb[0].mxu0
    %307 = vmatprep.mubr.bf16.mxu0 0
    %308 = vmatmul.mubr.bf16.gmra.mrb[0].mxu0 %v193
    %v309 = vpop.f32.mrb[0].mxu0
    %v310 = vadd.f32 %v76, %v309
    %v311 = vpop.f32.mrb[0].mxu0
    %v312 = vpop.f32.mrb[0].mxu0
    %v313 = vadd.f32 %v76, %v312
    %v314 = vpop.f32.mrb[0].mxu0
    %315 = vmatprep.mubr.bf16.mxu0 0
    %316 = vmatmul.mubr.bf16.gmra.mrb[0].mxu0 %v196
    %v317 = vpop.f32.mrb[0].mxu0
    %v318 = vadd.f32 %v76, %v317
    %v319 = vpop.f32.mrb[0].mxu0
    %v320 = vpop.f32.mrb[0].mxu0
    %v321 = vadd.f32 %v76, %v320
    %v322 = vpop.f32.mrb[0].mxu0
    %323 = vmatprep.mubr.bf16.mxu0 0
    %324 = vmatmul.mubr.bf16.gmra.mrb[0].mxu0 %v199
    %v325 = vpop.f32.mrb[0].mxu0
    %v326 = vadd.f32 %v76, %v325
    %v327 = vpop.f32.mrb[0].mxu0
    %v328 = vpop.f32.mrb[0].mxu0
    %v329 = vadd.f32 %v76, %v328
    %v330 = vpop.f32.mrb[0].mxu0
    %331 = vmatprep.mubr.bf16.mxu0 0
    %332 = vmatmul.mubr.bf16.gmra.mrb[0].mxu0 %v202
    %v333 = vpop.f32.mrb[0].mxu0
    %v334 = vadd.f32 %v76, %v333
    %v335 = vpop.f32.mrb[0].mxu0
    %v336 = vpop.f32.mrb[0].mxu0
    %v337 = vadd.f32 %v76, %v336
    %v338 = vpop.f32.mrb[0].mxu0
    %339 = vmatprep.mubr.bf16.mxu0 0
    %340 = vmatmul.mubr.bf16.gmra.mrb[0].mxu0 %v205
    %v341 = vpop.f32.mrb[0].mxu0
    %v342 = vadd.f32 %v76, %v341
    %v343 = vpop.f32.mrb[0].mxu0
    %v344 = vpop.f32.mrb[0].mxu0
    %v345 = vadd.f32 %v76, %v344
    %v346 = vpop.f32.mrb[0].mxu0
    %347 = vmatprep.mubr.bf16.mxu0 0
    %348 = vmatmul.mubr.bf16.gmra.mrb[0].mxu0 %v208
    %v349 = vpop.f32.mrb[0].mxu0
    %v350 = vadd.f32 %v76, %v349
    %v351 = vpop.f32.mrb[0].mxu0
    %v352 = vpop.f32.mrb[0].mxu0
    %v353 = vadd.f32 %v76, %v352
    %v354 = vpop.f32.mrb[0].mxu0
    %355 = vmatprep.mubr.bf16.mxu0 0
    %356 = vmatmul.mubr.bf16.gmra.mrb[0].mxu0 %v211
    %v357 = vpop.f32.mrb[0].mxu0
    %v358 = vadd.f32 %v76, %v357
    %v359 = vpop.f32.mrb[0].mxu0
    %v360 = vpop.f32.mrb[0].mxu0
    %v361 = vadd.f32 %v76, %v360
    %v362 = vpop.f32.mrb[0].mxu0
    %363 = vmatprep.mubr.bf16.mxu0 0
    %364 = vmatmul.mubr.bf16.gmra.mrb[0].mxu0 %v214
    %v365 = vpop.f32.mrb[0].mxu0
    %v366 = vadd.f32 %v76, %v365
    %v367 = vpop.f32.mrb[0].mxu0
    %v368 = vpop.f32.mrb[0].mxu0
    %v369 = vadd.f32 %v76, %v368
    %v370 = vpop.f32.mrb[0].mxu0
    %371 = vmatprep.mubr.bf16.mxu0 0
    %372 = vmatmul.mubr.bf16.gmra.mrb[0].mxu0 %v217
    %v373 = vpop.f32.mrb[0].mxu0
    %v374 = vadd.f32 %v76, %v373
    %v375 = vpop.f32.mrb[0].mxu0
    %v376 = vpop.f32.mrb[0].mxu0
    %v377 = vadd.f32 %v76, %v376
    %v378 = vpop.f32.mrb[0].mxu0
    %379 = vdwg.mxu0
    %v380 = vtanh.pop %v254
    %v381 = vtanh.pop %v257
    %v382 = vtanh.pop %v262
    %v383 = vtanh.pop %v265
    %v384 = vtanh.pop %v270
    %v385 = vtanh.pop %v273
    %v386 = vtanh.pop %v278
    %v387 = vtanh.pop %v281
    %v388 = vtanh.pop %v286
    %v389 = vtanh.pop %v289
    %v390 = vtanh.pop %v294
    %v391 = vtanh.pop %v297
    %v392 = vtanh.pop %v302
    %v393 = vtanh.pop %v305
    %v394 = vtanh.pop %v310
    %v395 = vtanh.pop %v313
    %v396 = vtanh.pop %v318
    %v397 = vtanh.pop %v321
    %v398 = vtanh.pop %v326
    %v399 = vtanh.pop %v329
    %v400 = vtanh.pop %v334
    %v401 = vtanh.pop %v337
    %v402 = vtanh.pop %v342
    %v403 = vtanh.pop %v345
    %v404 = vtanh.pop %v350
    %v405 = vtanh.pop %v353
    %v406 = vtanh.pop %v358
    %v407 = vtanh.pop %v361
    %v408 = vtanh.pop %v366
    %v409 = vtanh.pop %v369
    %v410 = vtanh.pop %v374
    %v411 = vtanh.pop %v377
    %v412 = vpack.c.bf16 %v381, %v380
    %v413 = vpack.c.bf16 %v383, %v382
    %v414 = vpack.c.bf16 %v385, %v384
    %v415 = vpack.c.bf16 %v387, %v386
    %v416 = vpack.c.bf16 %v389, %v388
    %v417 = vpack.c.bf16 %v391, %v390
    %v418 = vpack.c.bf16 %v393, %v392
    %v419 = vpack.c.bf16 %v395, %v394
    %v420 = vpack.c.bf16 %v397, %v396
    %v421 = vpack.c.bf16 %v399, %v398
    %v422 = vpack.c.bf16 %v401, %v400
    %v423 = vpack.c.bf16 %v403, %v402
    %v424 = vpack.c.bf16 %v405, %v404
    %v425 = vpack.c.bf16 %v407, %v406
    %v426 = vpack.c.bf16 %v409, %v408
    %v427 = vpack.c.bf16 %v411, %v410
    %v428 = vld [vmem:[%s3] sm:$0xf]
    %v429 = vld [vmem:[%s3 + $0x4] sm:$0xf]
    %v430 = vld [vmem:[%s3 + $0x8] sm:$0xf]
    %v431 = vld [vmem:[%s3 + $0xc] sm:$0xf]
    %v432 = vld [vmem:[%s3 + $0x10] sm:$0xf]
    %v433 = vld [vmem:[%s3 + $0x14] sm:$0xf]
    %v434 = vld [vmem:[%s3 + $0x18] sm:$0xf]
    %v435 = vld [vmem:[%s3 + $0x1c] sm:$0xf]
    %v436 = vld [vmem:[%s4] sm:$0x1]
    %v438 = vlaneseq
    %v439 = vshrl.u32 %v438, 7
    %v440 = vsub.s32 0, %v439
    %v441 = vrot.slane %v436, %v440
    %v451 = vunpack.c.l.b16 %v428
    %v452 = vunpack.c.l.b16 %v429
    %v453 = vunpack.c.l.b16 %v430
    %v454 = vunpack.c.l.b16 %v431
    %v455 = vunpack.c.l.b16 %v432
    %v456 = vunpack.c.l.b16 %v433
    %v457 = vunpack.c.l.b16 %v434
    %v458 = vunpack.c.l.b16 %v435
    %v459 = vpack.c.b16 %v452, %v451
    %v460 = vpack.c.b16 %v454, %v453
    %v461 = vpack.c.b16 %v456, %v455
    %v462 = vpack.c.b16 %v458, %v457
    %vm467 = vcmask 523264
    %v469 = vsel %vm467, %v412, 0
    %v472 = vsel %vm467, %v413, 0
    %v475 = vsel %vm467, %v414, 0
    %v478 = vsel %vm467, %v415, 0
    %v481 = vsel %vm467, %v416, 0
    %v484 = vsel %vm467, %v417, 0
    %v487 = vsel %vm467, %v418, 0
    %v490 = vsel %vm467, %v419, 0
    %v493 = vsel %vm467, %v420, 0
    %v496 = vsel %vm467, %v421, 0
    %v499 = vsel %vm467, %v422, 0
    %v502 = vsel %vm467, %v423, 0
    %v505 = vsel %vm467, %v424, 0
    %v508 = vsel %vm467, %v425, 0
    %v511 = vsel %vm467, %v426, 0
    %v514 = vsel %vm467, %v427, 0
    %516 = vmatprep.subr.bf16.mxu0 0
    %517 = vmatpush1.bf16.msra.mxu0 %v459
    %518 = vmatprep.subr.bf16.mxu0 0
    %519 = vmatpush1.bf16.msra.mxu0 %v460
    %520 = vmatprep.subr.bf16.mxu0 0
    %521 = vmatpush1.bf16.msra.mxu0 %v461
    %522 = vmatprep.subr.bf16.mxu0 0
    %523 = vmatpush1.bf16.msra.mxu0 %v462
    %524 = vmatprep.subr.bf16.mxu0 0
    %525 = vmatpush1.bf16.msra.mxu0 0
    %526 = vmatprep.subr.bf16.mxu0 0
    %527 = vmatpush1.bf16.msra.mxu0 0
    %528 = vmatprep.subr.bf16.mxu0 0
    %529 = vmatpush1.bf16.msra.mxu0 0
    %530 = vmatprep.subr.bf16.mxu0 0
    %531 = vmatpush1.bf16.msra.mxu0 0
    %532 = vmatprep.subr.bf16.mxu0 0
    %533 = vmatpush1.bf16.msra.mxu0 0
    %534 = vmatprep.subr.bf16.mxu0 0
    %535 = vmatpush1.bf16.msra.mxu0 0
    %536 = vmatprep.subr.bf16.mxu0 0
    %537 = vmatpush1.bf16.msra.mxu0 0
    %538 = vmatprep.subr.bf16.mxu0 0
    %539 = vmatpush1.bf16.msra.mxu0 0
    %540 = vmatprep.subr.bf16.mxu0 0
    %541 = vmatpush1.bf16.msra.mxu0 0
    %542 = vmatprep.subr.bf16.mxu0 0
    %543 = vmatpush1.bf16.msra.mxu0 0
    %544 = vmatprep.subr.bf16.mxu0 0
    %545 = vmatpush1.bf16.msra.mxu0 0
    %546 = vmatprep.subr.bf16.mxu0 0
    %547 = vmatpush1.bf16.msra.mxu0 0
    %548 = vmatprep.mubr.bf16.mxu0 0
    %549 = vmatmul.mubr.bf16.gmra.mrb[0].mxu0 %v469
    %v550 = vpop.f32.mrb[0].mxu0
    %v551 = vadd.f32 %v441, %v550
    %v552 = vpop.f32.mrb[0].mxu0
    %v553 = vpop.f32.mrb[0].mxu0
    %v554 = vadd.f32 %v441, %v553
    %v555 = vpop.f32.mrb[0].mxu0
    %556 = vmatprep.mubr.bf16.mxu0 0
    %557 = vmatmul.mubr.bf16.gmra.mrb[0].mxu0 %v472
    %v558 = vpop.f32.mrb[0].mxu0
    %v559 = vadd.f32 %v441, %v558
    %v560 = vpop.f32.mrb[0].mxu0
    %v561 = vpop.f32.mrb[0].mxu0
    %v562 = vadd.f32 %v441, %v561
    %v563 = vpop.f32.mrb[0].mxu0
    %564 = vmatprep.mubr.bf16.mxu0 0
    %565 = vmatmul.mubr.bf16.gmra.mrb[0].mxu0 %v475
    %v566 = vpop.f32.mrb[0].mxu0
    %v567 = vadd.f32 %v441, %v566
    %v568 = vpop.f32.mrb[0].mxu0
    %v569 = vpop.f32.mrb[0].mxu0
    %v570 = vadd.f32 %v441, %v569
    %v571 = vpop.f32.mrb[0].mxu0
    %572 = vmatprep.mubr.bf16.mxu0 0
    %573 = vmatmul.mubr.bf16.gmra.mrb[0].mxu0 %v478
    %v574 = vpop.f32.mrb[0].mxu0
    %v575 = vadd.f32 %v441, %v574
    %v576 = vpop.f32.mrb[0].mxu0
    %v577 = vpop.f32.mrb[0].mxu0
    %v578 = vadd.f32 %v441, %v577
    %v579 = vpop.f32.mrb[0].mxu0
    %580 = vmatprep.mubr.bf16.mxu0 0
    %581 = vmatmul.mubr.bf16.gmra.mrb[0].mxu0 %v481
    %v582 = vpop.f32.mrb[0].mxu0
    %v583 = vadd.f32 %v441, %v582
    %v584 = vpop.f32.mrb[0].mxu0
    %v585 = vpop.f32.mrb[0].mxu0
    %v586 = vadd.f32 %v441, %v585
    %v587 = vpop.f32.mrb[0].mxu0
    %588 = vmatprep.mubr.bf16.mxu0 0
    %589 = vmatmul.mubr.bf16.gmra.mrb[0].mxu0 %v484
    %v590 = vpop.f32.mrb[0].mxu0
    %v591 = vadd.f32 %v441, %v590
    %v592 = vpop.f32.mrb[0].mxu0
    %v593 = vpop.f32.mrb[0].mxu0
    %v594 = vadd.f32 %v441, %v593
    %v595 = vpop.f32.mrb[0].mxu0
    %596 = vmatprep.mubr.bf16.mxu0 0
    %597 = vmatmul.mubr.bf16.gmra.mrb[0].mxu0 %v487
    %v598 = vpop.f32.mrb[0].mxu0
    %v599 = vadd.f32 %v441, %v598
    %v600 = vpop.f32.mrb[0].mxu0
    %v601 = vpop.f32.mrb[0].mxu0
    %v602 = vadd.f32 %v441, %v601
    %v603 = vpop.f32.mrb[0].mxu0
    %604 = vmatprep.mubr.bf16.mxu0 0
    %605 = vmatmul.mubr.bf16.gmra.mrb[0].mxu0 %v490
    %v606 = vpop.f32.mrb[0].mxu0
    %v607 = vadd.f32 %v441, %v606
    %v608 = vpop.f32.mrb[0].mxu0
    %v609 = vpop.f32.mrb[0].mxu0
    %v610 = vadd.f32 %v441, %v609
    %v611 = vpop.f32.mrb[0].mxu0
    %612 = vmatprep.mubr.bf16.mxu0 0
    %613 = vmatmul.mubr.bf16.gmra.mrb[0].mxu0 %v493
    %v614 = vpop.f32.mrb[0].mxu0
    %v615 = vadd.f32 %v441, %v614
    %v616 = vpop.f32.mrb[0].mxu0
    %v617 = vpop.f32.mrb[0].mxu0
    %v618 = vadd.f32 %v441, %v617
    %v619 = vpop.f32.mrb[0].mxu0
    %620 = vmatprep.mubr.bf16.mxu0 0
    %621 = vmatmul.mubr.bf16.gmra.mrb[0].mxu0 %v496
    %v622 = vpop.f32.mrb[0].mxu0
    %v623 = vadd.f32 %v441, %v622
    %v624 = vpop.f32.mrb[0].mxu0
    %v625 = vpop.f32.mrb[0].mxu0
    %v626 = vadd.f32 %v441, %v625
    %v627 = vpop.f32.mrb[0].mxu0
    %628 = vmatprep.mubr.bf16.mxu0 0
    %629 = vmatmul.mubr.bf16.gmra.mrb[0].mxu0 %v499
    %v630 = vpop.f32.mrb[0].mxu0
    %v631 = vadd.f32 %v441, %v630
    %v632 = vpop.f32.mrb[0].mxu0
    %v633 = vpop.f32.mrb[0].mxu0
    %v634 = vadd.f32 %v441, %v633
    %v635 = vpop.f32.mrb[0].mxu0
    %636 = vmatprep.mubr.bf16.mxu0 0
    %637 = vmatmul.mubr.bf16.gmra.mrb[0].mxu0 %v502
    %v638 = vpop.f32.mrb[0].mxu0
    %v639 = vadd.f32 %v441, %v638
    %v640 = vpop.f32.mrb[0].mxu0
    %v641 = vpop.f32.mrb[0].mxu0
    %v642 = vadd.f32 %v441, %v641
    %v643 = vpop.f32.mrb[0].mxu0
    %644 = vmatprep.mubr.bf16.mxu0 0
    %645 = vmatmul.mubr.bf16.gmra.mrb[0].mxu0 %v505
    %v646 = vpop.f32.mrb[0].mxu0
    %v647 = vadd.f32 %v441, %v646
    %v648 = vpop.f32.mrb[0].mxu0
    %v649 = vpop.f32.mrb[0].mxu0
    %v650 = vadd.f32 %v441, %v649
    %v651 = vpop.f32.mrb[0].mxu0
    %652 = vmatprep.mubr.bf16.mxu0 0
    %653 = vmatmul.mubr.bf16.gmra.mrb[0].mxu0 %v508
    %v654 = vpop.f32.mrb[0].mxu0
    %v655 = vadd.f32 %v441, %v654
    %v656 = vpop.f32.mrb[0].mxu0
    %v657 = vpop.f32.mrb[0].mxu0
    %v658 = vadd.f32 %v441, %v657
    %v659 = vpop.f32.mrb[0].mxu0
    %660 = vmatprep.mubr.bf16.mxu0 0
    %661 = vmatmul.mubr.bf16.gmra.mrb[0].mxu0 %v511
    %v662 = vpop.f32.mrb[0].mxu0
    %v663 = vadd.f32 %v441, %v662
    %v664 = vpop.f32.mrb[0].mxu0
    %v665 = vpop.f32.mrb[0].mxu0
    %v666 = vadd.f32 %v441, %v665
    %v667 = vpop.f32.mrb[0].mxu0
    %668 = vmatprep.mubr.bf16.mxu0 0
    %669 = vmatmul.mubr.bf16.gmra.mrb[0].mxu0 %v514
    %v670 = vpop.f32.mrb[0].mxu0
    %v671 = vadd.f32 %v441, %v670
    %v672 = vpop.f32.mrb[0].mxu0
    %v673 = vpop.f32.mrb[0].mxu0
    %v674 = vadd.f32 %v441, %v673
    %v675 = vpop.f32.mrb[0].mxu0
    %676 = vdwg.mxu0
    %v677 = vtanh.pop %v551
    %v678 = vtanh.pop %v554
    %v679 = vtanh.pop %v559
    %v680 = vtanh.pop %v562
    %v681 = vtanh.pop %v567
    %v682 = vtanh.pop %v570
    %v683 = vtanh.pop %v575
    %v684 = vtanh.pop %v578
    %v685 = vtanh.pop %v583
    %v686 = vtanh.pop %v586
    %v687 = vtanh.pop %v591
    %v688 = vtanh.pop %v594
    %v689 = vtanh.pop %v599
    %v690 = vtanh.pop %v602
    %v691 = vtanh.pop %v607
    %v692 = vtanh.pop %v610
    %v693 = vtanh.pop %v615
    %v694 = vtanh.pop %v618
    %v695 = vtanh.pop %v623
    %v696 = vtanh.pop %v626
    %v697 = vtanh.pop %v631
    %v698 = vtanh.pop %v634
    %v699 = vtanh.pop %v639
    %v700 = vtanh.pop %v642
    %v701 = vtanh.pop %v647
    %v702 = vtanh.pop %v650
    %v703 = vtanh.pop %v655
    %v704 = vtanh.pop %v658
    %v705 = vtanh.pop %v663
    %v706 = vtanh.pop %v666
    %v707 = vtanh.pop %v671
    %v708 = vtanh.pop %v674
    %v709 = vpack.c.bf16 %v678, %v677
    %v710 = vpack.c.bf16 %v680, %v679
    %v711 = vpack.c.bf16 %v682, %v681
    %v712 = vpack.c.bf16 %v684, %v683
    %v713 = vpack.c.bf16 %v686, %v685
    %v714 = vpack.c.bf16 %v688, %v687
    %v715 = vpack.c.bf16 %v690, %v689
    %v716 = vpack.c.bf16 %v692, %v691
    %v717 = vpack.c.bf16 %v694, %v693
    %v718 = vpack.c.bf16 %v696, %v695
    %v719 = vpack.c.bf16 %v698, %v697
    %v720 = vpack.c.bf16 %v700, %v699
    %v721 = vpack.c.bf16 %v702, %v701
    %v722 = vpack.c.bf16 %v704, %v703
    %v723 = vpack.c.bf16 %v706, %v705
    %v724 = vpack.c.bf16 %v708, %v707
    %v725 = vld [vmem:[%s5] sm:$0xf]
    %v726 = vld [vmem:[%s5 + $0x4] sm:$0xf]
    %v727 = vld [vmem:[%s5 + $0x8] sm:$0xf]
    %v728 = vld [vmem:[%s5 + $0xc] sm:$0xf]
    %v729 = vld [vmem:[%s6] sm:$0x1]
    %v731 = vlaneseq
    %v732 = vshrl.u32 %v731, 7
    %v733 = vsub.s32 0, %v732
    %v734 = vrot.slane %v729, %v733
    %v740 = vunpack.c.l.b16 %v725
    %v741 = vunpack.c.l.b16 %v726
    %v742 = vunpack.c.l.b16 %v727
    %v743 = vunpack.c.l.b16 %v728
    %v744 = vpack.c.b16 %v741, %v740
    %v745 = vpack.c.b16 %v743, %v742
    %v749 = vsel %vm170, %v709, 0
    %v752 = vsel %vm170, %v710, 0
    %v755 = vsel %vm170, %v711, 0
    %v758 = vsel %vm170, %v712, 0
    %v761 = vsel %vm170, %v713, 0
    %v764 = vsel %vm170, %v714, 0
    %v767 = vsel %vm170, %v715, 0
    %v770 = vsel %vm170, %v716, 0
    %v773 = vsel %vm170, %v717, 0
    %v776 = vsel %vm170, %v718, 0
    %v779 = vsel %vm170, %v719, 0
    %v782 = vsel %vm170, %v720, 0
    %v785 = vsel %vm170, %v721, 0
    %v788 = vsel %vm170, %v722, 0
    %v791 = vsel %vm170, %v723, 0
    %v794 = vsel %vm170, %v724, 0
    %796 = vmatprep.subr.bf16.mxu0 0
    %797 = vmatpush1.bf16.msra.mxu0 %v744
    %798 = vmatprep.subr.bf16.mxu0 0
    %799 = vmatpush1.bf16.msra.mxu0 %v745
    %800 = vmatprep.subr.bf16.mxu0 0
    %801 = vmatpush1.bf16.msra.mxu0 0
    %802 = vmatprep.subr.bf16.mxu0 0
    %803 = vmatpush1.bf16.msra.mxu0 0
    %804 = vmatprep.subr.bf16.mxu0 0
    %805 = vmatpush1.bf16.msra.mxu0 0
    %806 = vmatprep.subr.bf16.mxu0 0
    %807 = vmatpush1.bf16.msra.mxu0 0
    %808 = vmatprep.subr.bf16.mxu0 0
    %809 = vmatpush1.bf16.msra.mxu0 0
    %810 = vmatprep.subr.bf16.mxu0 0
    %811 = vmatpush1.bf16.msra.mxu0 0
    %812 = vmatprep.subr.bf16.mxu0 0
    %813 = vmatpush1.bf16.msra.mxu0 0
    %814 = vmatprep.subr.bf16.mxu0 0
    %815 = vmatpush1.bf16.msra.mxu0 0
    %816 = vmatprep.subr.bf16.mxu0 0
    %817 = vmatpush1.bf16.msra.mxu0 0
    %818 = vmatprep.subr.bf16.mxu0 0
    %819 = vmatpush1.bf16.msra.mxu0 0
    %820 = vmatprep.subr.bf16.mxu0 0
    %821 = vmatpush1.bf16.msra.mxu0 0
    %822 = vmatprep.subr.bf16.mxu0 0
    %823 = vmatpush1.bf16.msra.mxu0 0
    %824 = vmatprep.subr.bf16.mxu0 0
    %825 = vmatpush1.bf16.msra.mxu0 0
    %826 = vmatprep.subr.bf16.mxu0 0
    %827 = vmatpush1.bf16.msra.mxu0 0
    %828 = vmatprep.mubr.bf16.mxu0 0
    %829 = vmatmul.mubr.bf16.gmra.mrb[0].mxu0 %v749
    %v830 = vpop.f32.mrb[0].mxu0
    %v831 = vadd.f32 %v734, %v830
    %v832 = vpop.f32.mrb[0].mxu0
    %v833 = vpop.f32.mrb[0].mxu0
    %v834 = vadd.f32 %v734, %v833
    %v835 = vpop.f32.mrb[0].mxu0
    %836 = vmatprep.mubr.bf16.mxu0 0
    %837 = vmatmul.mubr.bf16.gmra.mrb[0].mxu0 %v752
    %v838 = vpop.f32.mrb[0].mxu0
    %v839 = vadd.f32 %v734, %v838
    %v840 = vpop.f32.mrb[0].mxu0
    %v841 = vpop.f32.mrb[0].mxu0
    %v842 = vadd.f32 %v734, %v841
    %v843 = vpop.f32.mrb[0].mxu0
    %844 = vmatprep.mubr.bf16.mxu0 0
    %845 = vmatmul.mubr.bf16.gmra.mrb[0].mxu0 %v755
    %v846 = vpop.f32.mrb[0].mxu0
    %v847 = vadd.f32 %v734, %v846
    %v848 = vpop.f32.mrb[0].mxu0
    %v849 = vpop.f32.mrb[0].mxu0
    %v850 = vadd.f32 %v734, %v849
    %v851 = vpop.f32.mrb[0].mxu0
    %852 = vmatprep.mubr.bf16.mxu0 0
    %853 = vmatmul.mubr.bf16.gmra.mrb[0].mxu0 %v758
    %v854 = vpop.f32.mrb[0].mxu0
    %v855 = vadd.f32 %v734, %v854
    %v856 = vpop.f32.mrb[0].mxu0
    %v857 = vpop.f32.mrb[0].mxu0
    %v858 = vadd.f32 %v734, %v857
    %v859 = vpop.f32.mrb[0].mxu0
    %860 = vmatprep.mubr.bf16.mxu0 0
    %861 = vmatmul.mubr.bf16.gmra.mrb[0].mxu0 %v761
    %v862 = vpop.f32.mrb[0].mxu0
    %v863 = vadd.f32 %v734, %v862
    %v864 = vpop.f32.mrb[0].mxu0
    %v865 = vpop.f32.mrb[0].mxu0
    %v866 = vadd.f32 %v734, %v865
    %v867 = vpop.f32.mrb[0].mxu0
    %868 = vmatprep.mubr.bf16.mxu0 0
    %869 = vmatmul.mubr.bf16.gmra.mrb[0].mxu0 %v764
    %v870 = vpop.f32.mrb[0].mxu0
    %v871 = vadd.f32 %v734, %v870
    %v872 = vpop.f32.mrb[0].mxu0
    %v873 = vpop.f32.mrb[0].mxu0
    %v874 = vadd.f32 %v734, %v873
    %v875 = vpop.f32.mrb[0].mxu0
    %876 = vmatprep.mubr.bf16.mxu0 0
    %877 = vmatmul.mubr.bf16.gmra.mrb[0].mxu0 %v767
    %v878 = vpop.f32.mrb[0].mxu0
    %v879 = vadd.f32 %v734, %v878
    %v880 = vpop.f32.mrb[0].mxu0
    %v881 = vpop.f32.mrb[0].mxu0
    %v882 = vadd.f32 %v734, %v881
    %v883 = vpop.f32.mrb[0].mxu0
    %884 = vmatprep.mubr.bf16.mxu0 0
    %885 = vmatmul.mubr.bf16.gmra.mrb[0].mxu0 %v770
    %v886 = vpop.f32.mrb[0].mxu0
    %v887 = vadd.f32 %v734, %v886
    %v888 = vpop.f32.mrb[0].mxu0
    %v889 = vpop.f32.mrb[0].mxu0
    %v890 = vadd.f32 %v734, %v889
    %v891 = vpop.f32.mrb[0].mxu0
    %892 = vmatprep.mubr.bf16.mxu0 0
    %893 = vmatmul.mubr.bf16.gmra.mrb[0].mxu0 %v773
    %v894 = vpop.f32.mrb[0].mxu0
    %v895 = vadd.f32 %v734, %v894
    %v896 = vpop.f32.mrb[0].mxu0
    %v897 = vpop.f32.mrb[0].mxu0
    %v898 = vadd.f32 %v734, %v897
    %v899 = vpop.f32.mrb[0].mxu0
    %900 = vmatprep.mubr.bf16.mxu0 0
    %901 = vmatmul.mubr.bf16.gmra.mrb[0].mxu0 %v776
    %v902 = vpop.f32.mrb[0].mxu0
    %v903 = vadd.f32 %v734, %v902
    %v904 = vpop.f32.mrb[0].mxu0
    %v905 = vpop.f32.mrb[0].mxu0
    %v906 = vadd.f32 %v734, %v905
    %v907 = vpop.f32.mrb[0].mxu0
    %908 = vmatprep.mubr.bf16.mxu0 0
    %909 = vmatmul.mubr.bf16.gmra.mrb[0].mxu0 %v779
    %v910 = vpop.f32.mrb[0].mxu0
    %v911 = vadd.f32 %v734, %v910
    %v912 = vpop.f32.mrb[0].mxu0
    %v913 = vpop.f32.mrb[0].mxu0
    %v914 = vadd.f32 %v734, %v913
    %v915 = vpop.f32.mrb[0].mxu0
    %916 = vmatprep.mubr.bf16.mxu0 0
    %917 = vmatmul.mubr.bf16.gmra.mrb[0].mxu0 %v782
    %v918 = vpop.f32.mrb[0].mxu0
    %v919 = vadd.f32 %v734, %v918
    %v920 = vpop.f32.mrb[0].mxu0
    %v921 = vpop.f32.mrb[0].mxu0
    %v922 = vadd.f32 %v734, %v921
    %v923 = vpop.f32.mrb[0].mxu0
    %924 = vmatprep.mubr.bf16.mxu0 0
    %925 = vmatmul.mubr.bf16.gmra.mrb[0].mxu0 %v785
    %v926 = vpop.f32.mrb[0].mxu0
    %v927 = vadd.f32 %v734, %v926
    %v928 = vpop.f32.mrb[0].mxu0
    %v929 = vpop.f32.mrb[0].mxu0
    %v930 = vadd.f32 %v734, %v929
    %v931 = vpop.f32.mrb[0].mxu0
    %932 = vmatprep.mubr.bf16.mxu0 0
    %933 = vmatmul.mubr.bf16.gmra.mrb[0].mxu0 %v788
    %v934 = vpop.f32.mrb[0].mxu0
    %v935 = vadd.f32 %v734, %v934
    %v936 = vpop.f32.mrb[0].mxu0
    %v937 = vpop.f32.mrb[0].mxu0
    %v938 = vadd.f32 %v734, %v937
    %v939 = vpop.f32.mrb[0].mxu0
    %940 = vmatprep.mubr.bf16.mxu0 0
    %941 = vmatmul.mubr.bf16.gmra.mrb[0].mxu0 %v791
    %v942 = vpop.f32.mrb[0].mxu0
    %v943 = vadd.f32 %v734, %v942
    %v944 = vpop.f32.mrb[0].mxu0
    %v945 = vpop.f32.mrb[0].mxu0
    %v946 = vadd.f32 %v734, %v945
    %v947 = vpop.f32.mrb[0].mxu0
    %948 = vmatprep.mubr.bf16.mxu0 0
    %949 = vmatmul.mubr.bf16.gmra.mrb[0].mxu0 %v794
    %v950 = vpop.f32.mrb[0].mxu0
    %v951 = vadd.f32 %v734, %v950
    %v952 = vpop.f32.mrb[0].mxu0
    %v953 = vpop.f32.mrb[0].mxu0
    %v954 = vadd.f32 %v734, %v953
    %v955 = vpop.f32.mrb[0].mxu0
    %956 = vdwg.mxu0
    %v957 = vtanh.pop %v831
    %v958 = vtanh.pop %v834
    %v959 = vtanh.pop %v839
    %v960 = vtanh.pop %v842
    %v961 = vtanh.pop %v847
    %v962 = vtanh.pop %v850
    %v963 = vtanh.pop %v855
    %v964 = vtanh.pop %v858
    %v965 = vtanh.pop %v863
    %v966 = vtanh.pop %v866
    %v967 = vtanh.pop %v871
    %v968 = vtanh.pop %v874
    %v969 = vtanh.pop %v879
    %v970 = vtanh.pop %v882
    %v971 = vtanh.pop %v887
    %v972 = vtanh.pop %v890
    %v973 = vtanh.pop %v895
    %v974 = vtanh.pop %v898
    %v975 = vtanh.pop %v903
    %v976 = vtanh.pop %v906
    %v977 = vtanh.pop %v911
    %v978 = vtanh.pop %v914
    %v979 = vtanh.pop %v919
    %v980 = vtanh.pop %v922
    %v981 = vtanh.pop %v927
    %v982 = vtanh.pop %v930
    %v983 = vtanh.pop %v935
    %v984 = vtanh.pop %v938
    %v985 = vtanh.pop %v943
    %v986 = vtanh.pop %v946
    %v987 = vtanh.pop %v951
    %v988 = vtanh.pop %v954
    %v989 = vpack.c.bf16 %v958, %v957
    %v990 = vpack.c.bf16 %v960, %v959
    %v991 = vpack.c.bf16 %v962, %v961
    %v992 = vpack.c.bf16 %v964, %v963
    %v993 = vpack.c.bf16 %v966, %v965
    %v994 = vpack.c.bf16 %v968, %v967
    %v995 = vpack.c.bf16 %v970, %v969
    %v996 = vpack.c.bf16 %v972, %v971
    %v997 = vpack.c.bf16 %v974, %v973
    %v998 = vpack.c.bf16 %v976, %v975
    %v999 = vpack.c.bf16 %v978, %v977
    %v1000 = vpack.c.bf16 %v980, %v979
    %v1001 = vpack.c.bf16 %v982, %v981
    %v1002 = vpack.c.bf16 %v984, %v983
    %v1003 = vpack.c.bf16 %v986, %v985
    %v1004 = vpack.c.bf16 %v988, %v987
    %v1005 = vld [vmem:[%s7] sm:$0x1]
    %s1006 = sld [smem:[#allocation2]]
    %v1007 = vstv %s1006
    %v1009 = vsel %vm170, %v1005, 0
    %v1012 = vsel %vm170, %v989, 0
    %v1015 = vsel %vm170, %v990, 0
    %v1018 = vsel %vm170, %v991, 0
    %v1021 = vsel %vm170, %v992, 0
    %v1024 = vsel %vm170, %v993, 0
    %v1027 = vsel %vm170, %v994, 0
    %v1030 = vsel %vm170, %v995, 0
    %v1033 = vsel %vm170, %v996, 0
    %v1036 = vsel %vm170, %v997, 0
    %v1039 = vsel %vm170, %v998, 0
    %v1042 = vsel %vm170, %v999, 0
    %v1045 = vsel %vm170, %v1000, 0
    %v1048 = vsel %vm170, %v1001, 0
    %v1051 = vsel %vm170, %v1002, 0
    %v1054 = vsel %vm170, %v1003, 0
    %v1057 = vsel %vm170, %v1004, 0
    %1059 = vmatprep.subr.bf16.mxu0 0
    %1060 = vmatpush1.bf16.xpose.msra.mxu0 %v1012
    %1061 = vmatprep.subr.bf16.mxu0 0
    %1062 = vmatpush1.bf16.xpose.msra.mxu0 %v1015
    %1063 = vmatprep.subr.bf16.mxu0 0
    %1064 = vmatpush1.bf16.xpose.msra.mxu0 %v1018
    %1065 = vmatprep.subr.bf16.mxu0 0
    %1066 = vmatpush1.bf16.xpose.msra.mxu0 %v1021
    %1067 = vmatprep.subr.bf16.mxu0 0
    %1068 = vmatpush1.bf16.xpose.msra.mxu0 %v1024
    %1069 = vmatprep.subr.bf16.mxu0 0
    %1070 = vmatpush1.bf16.xpose.msra.mxu0 %v1027
    %1071 = vmatprep.subr.bf16.mxu0 0
    %1072 = vmatpush1.bf16.xpose.msra.mxu0 %v1030
    %1073 = vmatprep.subr.bf16.mxu0 0
    %1074 = vmatpush1.bf16.xpose.msra.mxu0 %v1033
    %1075 = vmatprep.subr.bf16.mxu0 0
    %1076 = vmatpush1.bf16.xpose.msra.mxu0 %v1036
    %1077 = vmatprep.subr.bf16.mxu0 0
    %1078 = vmatpush1.bf16.xpose.msra.mxu0 %v1039
    %1079 = vmatprep.subr.bf16.mxu0 0
    %1080 = vmatpush1.bf16.xpose.msra.mxu0 %v1042
    %1081 = vmatprep.subr.bf16.mxu0 0
    %1082 = vmatpush1.bf16.xpose.msra.mxu0 %v1045
    %1083 = vmatprep.subr.bf16.mxu0 0
    %1084 = vmatpush1.bf16.xpose.msra.mxu0 %v1048
    %1085 = vmatprep.subr.bf16.mxu0 0
    %1086 = vmatpush1.bf16.xpose.msra.mxu0 %v1051
    %1087 = vmatprep.subr.bf16.mxu0 0
    %1088 = vmatpush1.bf16.xpose.msra.mxu0 %v1054
    %1089 = vmatprep.subr.bf16.mxu0 0
    %1090 = vmatpush1.bf16.xpose.msra.mxu0 %v1057
    %1091 = vmatprep.mubr.bf16.mxu0 0
    %1092 = vmatmul.mubr.bf16.gmra.mrb[0].mxu0 %v1009
    %v1093 = vpop.f32.mrb[0].mxu0
    %v1094 = vadd.f32 %v1007, %v1093
    %v1095 = vpop.f32.mrb[0].mxu0
    %v1096 = vadd.f32 %v1007, %v1095
    %v1097 = vpop.f32.mrb[0].mxu0
    %v1098 = vpop.f32.mrb[0].mxu0
    %1099 = vdwg.mxu0
    %v1102 = vcombine.low %v1094, %v1096
    %v1104 = vunpack.c.l.s4 1966171168
    %v1105 = vunpack.c.0.s8 %v1104
    %v1106 = vlaneseq
    %v1107 = vshrl.u32 %v1106, 7
    %v1108 = vsub.s32 %v1105, %v1107
    %v1109 = vrot.slane %v1102, %v1108
    %v1111 = vunpack.c.l.s4 1966171168
    %v1112 = vunpack.c.0.s8 %v1111
    %v1113 = vlaneseq
    %v1114 = vshrl.u32 %v1113, 7
    %v1115 = vsub.s32 %v1112, %v1114
    %v1116 = vrot.slane %v1109, %v1115
    %v1118 = vlaneseq
    %vm1119 = vcmp.ge.s32.totalorder %v1118, 0
    %vm1120 = vcmp.lt.s32.totalorder %v1118, 256
    %vm1121 = vmand %vm1119, %vm1120
    %1122 = vst.msk [vmem:[#allocation3] sm:$0x3] %vm1121, %v1116
    // Predicated region
    $region38: #{tpu_custom_call.1} parent=1 // pred_check
      _
    $region39: #{tpu_custom_call.1} parent=1 // pred_check_branch
      %1124 = sbr.rel (0) target = $region41
    $region40: #{tpu_custom_call.1} parent=1 // pred_region
      %s1126 = ssub.s32 32, 32
      %1127 = vsyncadd [#allocation4], %s1126
      %s1129 = sshll.u32 [#allocation3], 4
      %s1130 = int_to_ptr.vmem [resolvable:$true] %s1129
      %1132 = dma.vmem_to_hbm [thread:$0]  %s1130, 32, %s9, [#allocation4]
    $region41: #{tpu_custom_call.1} parent=1 // pred_fallthru
      _
    // Predicated region
    $region42: #{tpu_custom_call.1} parent=1 // pred_check
      _
    $region43: #{tpu_custom_call.1} parent=1 // pred_check_branch
      %1134 = sbr.rel (0) target = $region45
    $region44: #{tpu_custom_call.1} parent=1 // pred_region
      %1135 = dma.done [#allocation4], 32
    $region45: #{tpu_custom_call.1} parent=1 // pred_fallthru
      _
    %1136 = vsyncpa [#allocation4], 1

</llo_original>
